<compile_context>
chip_gen: v7x
topology: tpu7x:2x2x1
jax: 0.10.0
libtpu: 0.0.40
codegen_flags: <defaults>
</compile_context>

<pallas_src>
import functools

import jax
import jax.numpy as jnp
from jax.experimental import pallas as pl
from jax.experimental.pallas import tpu as pltpu

# ----- stand-in for `conf` --------------------------------------------------
WORD_DIM = 32       # conf.word_dim
NUM_FILTERS = 32    # conf.num_filters
KERNEL_SIZE = 3     # conf.kernel_size (padding=1 keeps seq length)
PADDING = 1
DROPOUT_P = 0.2     # conf.dropout
VOCAB = 100
SEQ_LEN = 8
BATCH = 2
LANE = 128          # TPU lane width; filters padded to this for dense stores
MAX_TB = 1024       # titles per grid step (v5e/v6e; fits v7x 64 MiB after the
                    # bf16-im2col / mask-layout / bf16-output trims below)


def _round_up(x, m):
    return (x + m - 1) // m * m


def _vmem_budget_bytes(TB, L, Lp, D, K, Fp):
    """Rough per-step VMEM estimate (padded tiles, double-buffered I/O)."""
    def tile(rows, cols, itemsize):
        sub = 8 * (4 // itemsize)          # 8 sublanes f32, 16 bf16
        return _round_up(rows, sub) * _round_up(cols, LANE) * itemsize
    x_blk = TB * tile(Lp, D, 2)            # bf16 input block
    mask_blk = tile(TB, L, 4)
    w_blk = tile(K * D, Fp, 2)
    b_blk = tile(1, Fp, 4)
    out_blk = tile(TB, Fp, 2)
    pipelined = 2 * (x_blk + mask_blk + w_blk + b_blk + out_blk)
    im2col = tile(TB * L, K * D, 2)
    y_f32 = tile(TB * L, Fp, 4)
    y3_f32 = TB * tile(L, Fp, 4)
    small = 4 * tile(TB, L, 4)
    temps = im2col + y_f32 + y3_f32 + small
    return pipelined + 2 * temps           # 2x headroom for compiler copies


def title_encoder_kernel(x_ref, mask_ref, wconv_ref, bias_ref, out_ref, *,
                         num_filters):
    """Batch-blocked title encoder.

    x_ref    : (TB, L + 2*PAD, D) bf16  zero-padded embedded titles
    mask_ref : (TB, L)            f32   (token_id > 0) mask (lane-dense)
    wconv_ref: (K*D, Fp)          bf16  conv weight, tap-major im2col layout,
                                        with Wc @ w_lin fused in at column
                                        `num_filters`
    bias_ref : (1, Fp)            f32   conv bias row; column `num_filters`
                                        holds b_conv . w_lin + b_lin
    out_ref  : (TB, Fp)           bf16  attended title vectors e_t
    """
    TB, Lp, D = x_ref.shape
    L = mask_ref.shape[1]
    K = Lp - L + 1
    Fp = out_ref.shape[-1]

    # im2col built directly in bf16 (no f32 roundtrip): static shifted slices
    # concatenated along the lane dim, then leading dims collapsed for one
    # fused (TB*L, K*D) x (K*D, Fp) MXU matmul with f32 accumulation.
    x = x_ref[...]                                               # (TB, Lp, D) bf16
    im2col = jnp.concatenate([x[:, k:k + L, :] for k in range(K)], axis=-1)
    im2col = im2col.reshape(TB * L, K * D)                       # (TB*L, K*D)

    y = jnp.dot(im2col, wconv_ref[...],
                preferred_element_type=jnp.float32)              # (TB*L, Fp) f32
    y = y + bias_ref[...]                                        # lane-dense bias
    y3 = y.reshape(TB, L, Fp)                                    # (TB, L, Fp)

    # Attention logits come out of the fused matmul at lane `num_filters`
    # (no broadcast-multiply / lane reduce needed).
    logits = y3[:, :, num_filters]                               # (TB, L)
    a = jnp.exp(jnp.tanh(logits)) * mask_ref[...]                # (TB, L)

    # alpha = a / (sum_L(a) + 1e-6);  e_t = sum_L(alpha * y)
    # (epsilon keeps fully-masked padded rows at alpha = 0, not NaN)
    denom = jnp.sum(a, axis=1, keepdims=True) + 1e-6             # (TB, 1)
    alpha = a / denom                                            # (TB, L)
    e_t = jnp.sum(alpha[:, :, None] * y3, axis=1)                # (TB, Fp)
    out_ref[...] = e_t.astype(out_ref.dtype)


def title_encoder_forward(tokens, emb_table, w_conv, b_conv, w_lin, b_lin):
    """tokens: (B, L) int32; returns e_t: (B, NUM_FILTERS) float32."""
    B, L = tokens.shape
    D = emb_table.shape[1]
    F_, _, K = w_conv.shape
    # The kernel re-derives K as Lp - L + 1, which only equals the conv
    # kernel size for 'same' padding.
    assert 2 * PADDING + 1 == K, "kernel assumes 'same' padding (2*PAD+1 == K)"
    Lp = L + 2 * PADDING
    Fp = _round_up(max(F_ + 1, LANE), LANE)   # +1 lane for the fused logit col

    # Titles per grid step.  For B > MAX_TB the grid has >= 2 steps and the
    # "parallel" batch axis shards across v7x's two TensorCores.
    TB = min(B, MAX_TB)
    Bp = _round_up(B, TB)                     # pad batch to a multiple of TB

    # --- glue (embedding gather, padding, weight relayout) in plain JAX ---
    tokens_p = jnp.pad(tokens, ((0, Bp - B), (0, 0)))                # pad ids=0
    emb = jnp.take(emb_table, tokens_p, axis=0).astype(jnp.bfloat16)  # (Bp,L,D)
    x_pad = jnp.pad(emb, ((0, 0), (PADDING, PADDING), (0, 0)))       # (Bp,Lp,D)
    mask = (tokens_p > 0).astype(jnp.float32)                        # (Bp, L)

    # Conv weight -> tap-major im2col layout (K*D, F_), plus one fused
    # attention-projection column Wc @ w_lin at index F_, zero-padded to Fp.
    w_conv_2d = jnp.transpose(w_conv, (2, 1, 0)).reshape(K * D, F_)  # f32
    w_attn_col = w_conv_2d @ w_lin.reshape(F_, 1)                    # (K*D, 1)
    w_fused = jnp.concatenate([w_conv_2d, w_attn_col], axis=1)       # (K*D,F_+1)
    w_fused = jnp.pad(w_fused,
                      ((0, 0), (0, Fp - (F_ + 1)))).astype(jnp.bfloat16)

    bias_logit = jnp.dot(b_conv, w_lin.reshape(F_)) + b_lin[0]       # scalar
    bias_row = jnp.concatenate([b_conv, bias_logit[None]])           # (F_+1,)
    bias_row = jnp.pad(bias_row, (0, Fp - (F_ + 1)))
    bias_row = bias_row.reshape(1, Fp).astype(jnp.float32)

    vmem_limit = int(min(64 * 1024 * 1024,                           # v7x phys
                         max(32 * 1024 * 1024,
                             _vmem_budget_bytes(TB, L, Lp, D, K, Fp))))

    out = pl.pallas_call(
        functools.partial(title_encoder_kernel, num_filters=F_),
        out_shape=jax.ShapeDtypeStruct((Bp, Fp), jnp.bfloat16),
        grid_spec=pltpu.PrefetchScalarGridSpec(
            num_scalar_prefetch=0,
            grid=(Bp // TB,),
            in_specs=[
                pl.BlockSpec((TB, Lp, D), lambda b: (b, 0, 0)),   # x_pad
                pl.BlockSpec((TB, L), lambda b: (b, 0)),          # mask
                pl.BlockSpec((K * D, Fp), lambda b: (0, 0)),      # fused W
                pl.BlockSpec((1, Fp), lambda b: (0, 0)),          # bias row
            ],
            out_specs=pl.BlockSpec((TB, Fp), lambda b: (b, 0)),
        ),
        compiler_params=pltpu.CompilerParams(
            dimension_semantics=("parallel",),
            vmem_limit_bytes=vmem_limit),
    )(x_pad, mask, w_fused, bias_row)
    return out[:B, :F_].astype(jnp.float32)


def _reference_forward(tokens, emb_table, w_conv, b_conv, w_lin, b_lin,
                       matmul_dtype=jnp.float32):
    """Pure-JAX reference mirroring the PyTorch forward (dropout = identity).

    matmul_dtype=bfloat16 reproduces the kernel's rounding of the conv-matmul
    operands (accumulation stays f32) for a tight implementation check.
    """
    B, L = tokens.shape
    F_ = w_conv.shape[0]
    emb = jnp.take(emb_table, tokens, axis=0)
    emb = emb.astype(matmul_dtype).astype(jnp.float32)               # (B, L, D)
    wc = w_conv.astype(matmul_dtype).astype(jnp.float32)             # (F, D, K)
    x_pad = jnp.pad(emb, ((0, 0), (PADDING, PADDING), (0, 0)))
    y = jnp.zeros((B, L, F_), jnp.float32) + b_conv[None, None, :]
    for k in range(KERNEL_SIZE):
        y = y + jnp.einsum("bld,fd->blf", x_pad[:, k:k + L, :], wc[:, :, k],
                           precision="highest")
    logits = jnp.einsum("blf,of->blo", y, w_lin,
                        precision="highest")[..., 0] + b_lin[0]
    a = jnp.exp(jnp.tanh(logits)) * (tokens > 0).astype(jnp.float32)
    alpha = a / (jnp.sum(a, axis=1, keepdims=True) + 1e-6)
    return jnp.sum(alpha[..., None] * y, axis=1)


def _xavier_uniform(key, shape, fan_in, fan_out, dtype=jnp.float32):
    bound = (6.0 / (fan_in + fan_out)) ** 0.5
    return jax.random.uniform(key, shape, dtype, -bound, bound)


if __name__ == "__main__":
    key = jax.random.PRNGKey(0)
    k_emb, k_conv, k_lin, k_tok = jax.random.split(key, 4)

    # Parameters (deterministic, matching nn.Module init shapes)
    emb_table = jax.random.normal(k_emb, (VOCAB, WORD_DIM), jnp.float32)
    w_conv = _xavier_uniform(k_conv, (NUM_FILTERS, WORD_DIM, KERNEL_SIZE),
                             fan_in=WORD_DIM * KERNEL_SIZE,
                             fan_out=NUM_FILTERS * KERNEL_SIZE)
    b_conv = jnp.zeros((NUM_FILTERS,), jnp.float32)
    w_lin = _xavier_uniform(k_lin, (1, NUM_FILTERS),
                            fan_in=NUM_FILTERS, fan_out=1)
    b_lin = jnp.zeros((1,), jnp.float32)

    # Inputs: token ids, 0 == padding
    tokens = jax.random.randint(k_tok, (BATCH, SEQ_LEN), 0, VOCAB, jnp.int32)

    e_t = title_encoder_forward(tokens, emb_table, w_conv, b_conv, w_lin, b_lin)
    e_t = jax.block_until_ready(e_t)
    assert e_t.shape == (BATCH, NUM_FILTERS)

    # Tight check: reference computed with the same bf16-rounded matmul
    # inputs (kernel additionally rounds the fused attention column and the
    # output to bf16, hence ~1e-2 tolerance).
    ref_bf16 = _reference_forward(tokens, emb_table, w_conv, b_conv, w_lin,
                                  b_lin, matmul_dtype=jnp.bfloat16)
    assert jnp.allclose(e_t, ref_bf16, rtol=1e-2, atol=1e-2), \
        "mismatch vs bf16-matched reference"

    # Loose check vs the pure-f32 module semantics (bf16 matmul/output drift).
    ref_f32 = _reference_forward(tokens, emb_table, w_conv, b_conv, w_lin,
                                 b_lin)
    assert jnp.allclose(e_t, ref_f32, rtol=1e-1, atol=1e-1), \
        "mismatch vs f32 reference"

    print("KERNEL_OK")
</pallas_src>

<mosaic_0001>
module attributes {stable_mosaic.version = 11 : i64} {
  func.func @title_encoder_kernel(%arg0: i32, %arg1: memref<2x10x32xbf16, #tpu.memory_space<vmem>>, %arg2: memref<2x8xf32, #tpu.memory_space<vmem>>, %arg3: memref<96x128xbf16, #tpu.memory_space<vmem>>, %arg4: memref<1x128xf32, #tpu.memory_space<vmem>>, %arg5: memref<2x128xbf16, #tpu.memory_space<vmem>>) attributes {dimension_semantics = [#tpu.dimension_semantics<parallel>], iteration_bounds = array<i64: 1>, scalar_prefetch = 0 : i64, scratch_operands = 0 : i64, tpu.core_type = #tpu.core_type<tc>, window_params = [{transform_indices = @transform_0, window_bounds = array<i64: 2, 10, 32>}, {transform_indices = @transform_1, window_bounds = array<i64: 2, 8>}, {pipeline_mode = #tpu.pipeline_mode<synchronous>, transform_indices = @transform_2, window_bounds = array<i64: 96, 128>}, {pipeline_mode = #tpu.pipeline_mode<synchronous>, transform_indices = @transform_3, window_bounds = array<i64: 1, 128>}, {transform_indices = @transform_4, window_bounds = array<i64: 2, 128>}]} {
    %c0 = arith.constant 0 : index
    %c0_0 = arith.constant 0 : index
    %c0_1 = arith.constant 0 : index
    %0 = vector.load %arg1[%c0, %c0_0, %c0_1] : memref<2x10x32xbf16, #tpu.memory_space<vmem>>, vector<2x10x32xbf16>
    %1 = vector.extract_strided_slice %0 {offsets = [0, 0, 0], sizes = [2, 8, 32], strides = [1, 1, 1]} : vector<2x10x32xbf16> to vector<2x8x32xbf16>
    %2 = vector.extract_strided_slice %0 {offsets = [0, 1, 0], sizes = [2, 8, 32], strides = [1, 1, 1]} : vector<2x10x32xbf16> to vector<2x8x32xbf16>
    %3 = vector.extract_strided_slice %0 {offsets = [0, 2, 0], sizes = [2, 8, 32], strides = [1, 1, 1]} : vector<2x10x32xbf16> to vector<2x8x32xbf16>
    %4 = tpu.concatenate %1, %2, %3 in 2 : vector<2x8x32xbf16>, vector<2x8x32xbf16>, vector<2x8x32xbf16> -> vector<2x8x96xbf16>
    %5 = vector.shape_cast %4 : vector<2x8x96xbf16> to vector<16x96xbf16>
    %c0_2 = arith.constant 0 : index
    %c0_3 = arith.constant 0 : index
    %6 = vector.load %arg3[%c0_2, %c0_3] : memref<96x128xbf16, #tpu.memory_space<vmem>>, vector<96x128xbf16>
    %cst = arith.constant dense<0.000000e+00> : vector<16x128xf32>
    %7 = tpu.matmul %5, %6, %cst {dimension_numbers = #tpu.dot_dimension_numbers<[1], [0], [0], [1], [0, 0, 1, 1], [], []>} : vector<16x96xbf16>, vector<96x128xbf16>, vector<16x128xf32> -> vector<16x128xf32>
    %c0_4 = arith.constant 0 : index
    %c0_5 = arith.constant 0 : index
    %8 = vector.load %arg4[%c0_4, %c0_5] : memref<1x128xf32, #tpu.memory_space<vmem>>, vector<1x128xf32>
    %9 = vector.broadcast %8 : vector<1x128xf32> to vector<16x128xf32>
    %10 = arith.addf %7, %9 : vector<16x128xf32>
    %11 = vector.shape_cast %10 : vector<16x128xf32> to vector<2x8x128xf32>
    %12 = vector.extract_strided_slice %11 {offsets = [0, 0, 32], sizes = [2, 8, 1], strides = [1, 1, 1]} : vector<2x8x128xf32> to vector<2x8x1xf32>
    %13 = vector.shape_cast %12 : vector<2x8x1xf32> to vector<2x8xf32>
    %14 = math.tanh %13 : vector<2x8xf32>
    %15 = math.exp %14 : vector<2x8xf32>
    %c0_6 = arith.constant 0 : index
    %c0_7 = arith.constant 0 : index
    %16 = vector.load %arg2[%c0_6, %c0_7] : memref<2x8xf32, #tpu.memory_space<vmem>>, vector<2x8xf32>
    %17 = arith.mulf %15, %16 : vector<2x8xf32>
    %cst_8 = arith.constant dense<0.000000e+00> : vector<2xf32>
    %18 = vector.multi_reduction <add>, %17, %cst_8 [1] : vector<2x8xf32> to vector<2xf32>
    %19 = vector.shape_cast %18 : vector<2xf32> to vector<2x1xf32>
    %cst_9 = arith.constant 9.99999997E-7 : f32
    %20 = vector.broadcast %cst_9 : f32 to vector<2x1xf32>
    %21 = arith.addf %19, %20 : vector<2x1xf32>
    %22 = vector.broadcast %21 : vector<2x1xf32> to vector<2x8xf32>
    %23 = arith.divf %17, %22 : vector<2x8xf32>
    %24 = vector.shape_cast %23 : vector<2x8xf32> to vector<2x8x1xf32>
    %25 = vector.broadcast %24 : vector<2x8x1xf32> to vector<2x8x128xf32>
    %26 = arith.mulf %25, %11 : vector<2x8x128xf32>
    %cst_10 = arith.constant dense<0.000000e+00> : vector<2x128xf32>
    %27 = vector.multi_reduction <add>, %26, %cst_10 [1] : vector<2x8x128xf32> to vector<2x128xf32>
    %28 = arith.truncf %27 : vector<2x128xf32> to vector<2x128xbf16>
    %c0_11 = arith.constant 0 : index
    %c0_12 = arith.constant 0 : index
    %29 = vector.load %arg5[%c0_11, %c0_12] : memref<2x128xbf16, #tpu.memory_space<vmem>>, vector<2x128xbf16>
    tpu.vector_store %arg5[%c0_11, %c0_12], %28 {strides = array<i32>} : memref<2x128xbf16, #tpu.memory_space<vmem>>, vector<2x128xbf16>,
    return
  }
  func.func @transform_0(%arg0: i32) -> (i32, i32, i32) {
    %c0_i32 = arith.constant 0 : i32
    %c0_i32_0 = arith.constant 0 : i32
    %c0_i32_1 = arith.constant 0 : i32
    return %arg0, %c0_i32, %c0_i32_0 : i32, i32, i32
  }
  func.func @transform_1(%arg0: i32) -> (i32, i32) {
    %c0_i32 = arith.constant 0 : i32
    %c0_i32_0 = arith.constant 0 : i32
    return %arg0, %c0_i32 : i32, i32
  }
  func.func @transform_2(%arg0: i32) -> (i32, i32) {
    %c0_i32 = arith.constant 0 : i32
    %c0_i32_0 = arith.constant 0 : i32
    %c0_i32_1 = arith.constant 0 : i32
    return %c0_i32, %c0_i32_0 : i32, i32
  }
  func.func @transform_3(%arg0: i32) -> (i32, i32) {
    %c0_i32 = arith.constant 0 : i32
    %c0_i32_0 = arith.constant 0 : i32
    %c0_i32_1 = arith.constant 0 : i32
    return %c0_i32, %c0_i32_0 : i32, i32
  }
  func.func @transform_4(%arg0: i32) -> (i32, i32) {
    %c0_i32 = arith.constant 0 : i32
    %c0_i32_0 = arith.constant 0 : i32
    return %arg0, %c0_i32 : i32, i32
  }
}

</mosaic_0001>

<llo_original>
// kernel: tpu_custom_call.1
$region0: #{tpu_custom_call.1}
  #allocation0 [shape = 'u32[]', space=smem, size = 0x4, offset = 0x4, fixed_abs, tag = 'smem constant byte address 0x4 - core index']
  #allocation1 [shape = 'u32[144,128]{1,0:T(1,128)}', space=vmem, size = 0x12000, scoped, tag = 'internal scratch']
  %s0 = inlined_call_operand.vmem [shape: bf16[2,10,32], index: 0, kind: input, shape index: {}]
  %s1 = inlined_call_operand.vmem [shape: f32[2,8], index: 1, kind: input, shape index: {}]
  %s2 = inlined_call_operand.hbm [shape: bf16[96,128], index: 2, kind: input, shape index: {}]
  %s3 = inlined_call_operand.vmem [shape: f32[1,128], index: 3, kind: input, shape index: {}]
  %s4 = inlined_call_operand.hbm [shape: bf16[2,128], index: 4, kind: output, shape index: {}]
  %s5 = sld [smem:[#allocation0]]
  $region30: #{tpu_custom_call.1} parent=0
    _
  %s7 = ssub.s32 1, %s5
  %s8 = scalar_select 0, %s7, %s5
  $region1: #{tpu_custom_call.1} parent=0
    #allocation2 [shape = 'u8[24576]{0}', space=vmem, size = 0x6000, scoped, tag = 'input window, operand 2, single buffered']
    #allocation3 [shape = 's32[1]{0}', space=sflag, size = 0x4, scoped, tag = 'scoped memory for tpu_custom_call.1']
    #allocation4 [shape = 's32[1]{0}', space=sflag, size = 0x4, scoped, tag = 'scoped memory for tpu_custom_call.1']
    #allocation5 [shape = 'u8[512]{0}', space=vmem, size = 0x400, scoped, tag = 'output window, operand 0, single buffered']
    %9 = vsyncpa [#allocation3], 0
    %10 = vsyncpa [#allocation4], 0
    // Predicated region
    $region2: #{tpu_custom_call.1} parent=1 // pred_check
      _
    $region3: #{tpu_custom_call.1} parent=1 // pred_check_branch
      %12 = sbr.rel (0) target = $region5
    $region4: #{tpu_custom_call.1} parent=1 // pred_region
      _
    $region5: #{tpu_custom_call.1} parent=1 // pred_fallthru
      _
    // Predicated region
    $region6: #{tpu_custom_call.1} parent=1 // pred_check
      _
    $region7: #{tpu_custom_call.1} parent=1 // pred_check_branch
      %14 = sbr.rel (0) target = $region9
    $region8: #{tpu_custom_call.1} parent=1 // pred_region
      _
    $region9: #{tpu_custom_call.1} parent=1 // pred_fallthru
      _
    // Predicated region
    $region10: #{tpu_custom_call.1} parent=1 // pred_check
      _
    $region11: #{tpu_custom_call.1} parent=1 // pred_check_branch
      %16 = sbr.rel (0) target = $region13
    $region12: #{tpu_custom_call.1} parent=1 // pred_region
      %s18 = ssub.s32 768, 768
      %19 = vsyncadd [#allocation3], %s18
      %s20 = sshll.u32 [#allocation2], 4
      %s21 = int_to_ptr.vmem [resolvable:$true] %s20
      %26 = dma.hbm_to_vmem [thread:$0]  %s2, 768, %s21, [#allocation3], 64, 64, 4
    $region13: #{tpu_custom_call.1} parent=1 // pred_fallthru
      _
    // Predicated region
    $region14: #{tpu_custom_call.1} parent=1 // pred_check
      _
    $region15: #{tpu_custom_call.1} parent=1 // pred_check_branch
      %28 = sbr.rel (0) target = $region17
    $region16: #{tpu_custom_call.1} parent=1 // pred_region
      _
    $region17: #{tpu_custom_call.1} parent=1 // pred_fallthru
      _
    // Predicated region
    $region18: #{tpu_custom_call.1} parent=1 // pred_check
      _
    $region19: #{tpu_custom_call.1} parent=1 // pred_check_branch
      %30 = sbr.rel (0) target = $region21
    $region20: #{tpu_custom_call.1} parent=1 // pred_region
      %31 = dma.done [#allocation3], 768
    $region21: #{tpu_custom_call.1} parent=1 // pred_fallthru
      _
    %v33 = vld [vmem:[%s0] sm:$0xf]
    %v34 = vld [vmem:[%s0 + $0x4] sm:$0x1]
    %v35 = vld [vmem:[%s0 + $0x8] sm:$0xf]
    %v36 = vld [vmem:[%s0 + $0xc] sm:$0x1]
    %v41 = vunpack.c.l.b16 %v33
    %v42 = vunpack.c.l.b16 %v34
    %v43 = vunpack.c.l.b16 %v35
    %v44 = vunpack.c.l.b16 %v36
    %v45 = vpack.c.b16 %v42, %v41
    %v46 = vpack.c.b16 %v44, %v43
    %v48 = vshrl.u32 %v45, 16
    %v50 = vshll.u32 %v45, 16
    %v52 = vrot.slane %v50, 1
    %v53 = vor.u32 %v48, %v52
    %v55 = vshrl.u32 %v46, 16
    %v57 = vshll.u32 %v46, 16
    %v59 = vrot.slane %v57, 1
    %v60 = vor.u32 %v55, %v59
    %61 = vrot.lane.b32.xlu0 %v53, 32
    %v62 = vpop.permute.xlu0 %61
    %63 = vrot.lane.b32.xlu0 %v60, 32
    %v64 = vpop.permute.xlu0 %63
    %v65 = vrot.slane %v45, 1
    %v66 = vrot.slane %v46, 1
    %67 = vrot.lane.b32.xlu0 %v65, 64
    %v68 = vpop.permute.xlu0 %67
    %69 = vrot.lane.b32.xlu0 %v66, 64
    %v70 = vpop.permute.xlu0 %69
    %vm71 = vcmask 261120
    %v74 = vsel %vm71, %v33, %v62
    %v77 = vsel %vm71, %v35, %v64
    %vm78 = vcmask 523264
    %v80 = vsel %vm78, %v74, %v68
    %v82 = vsel %vm78, %v77, %v70
    %v83 = vld [vmem:[#allocation2] sm:$0xf]
    %v84 = vld [vmem:[#allocation2 + $0x4] sm:$0xf]
    %v85 = vld [vmem:[#allocation2 + $0x8] sm:$0xf]
    %v86 = vld [vmem:[#allocation2 + $0xc] sm:$0xf]
    %v87 = vld [vmem:[#allocation2 + $0x10] sm:$0xf]
    %v88 = vld [vmem:[#allocation2 + $0x14] sm:$0xf]
    %v89 = vld [vmem:[#allocation2 + $0x18] sm:$0xf]
    %v90 = vld [vmem:[#allocation2 + $0x1c] sm:$0xf]
    %v91 = vld [vmem:[#allocation2 + $0x20] sm:$0xf]
    %v92 = vld [vmem:[#allocation2 + $0x24] sm:$0xf]
    %v93 = vld [vmem:[#allocation2 + $0x28] sm:$0xf]
    %v94 = vld [vmem:[#allocation2 + $0x2c] sm:$0xf]
    %v95 = vld [vmem:[%s3] sm:$0x1]
    %v97 = vlaneseq
    %v98 = vshrl.u32 %v97, 7
    %v99 = vsub.s32 0, %v98
    %v100 = vrot.slane %v95, %v99
    %v104 = vunpack.c.l.b16 %v80
    %v105 = vunpack.c.l.b16 %v82
    %v106 = vpack.c.b16 %v105, %v104
    %v119 = vunpack.c.l.b16 %v83
    %v120 = vunpack.c.l.b16 %v84
    %v121 = vunpack.c.l.b16 %v85
    %v122 = vunpack.c.l.b16 %v86
    %v123 = vunpack.c.l.b16 %v87
    %v124 = vunpack.c.l.b16 %v88
    %v125 = vunpack.c.l.b16 %v89
    %v126 = vunpack.c.l.b16 %v90
    %v127 = vunpack.c.l.b16 %v91
    %v128 = vunpack.c.l.b16 %v92
    %v129 = vunpack.c.l.b16 %v93
    %v130 = vunpack.c.l.b16 %v94
    %v131 = vpack.c.b16 %v120, %v119
    %v132 = vpack.c.b16 %v122, %v121
    %v133 = vpack.c.b16 %v124, %v123
    %v134 = vpack.c.b16 %v126, %v125
    %v135 = vpack.c.b16 %v128, %v127
    %v136 = vpack.c.b16 %v130, %v129
    %vm143 = vcmask 785408
    %v145 = vsel %vm143, %v106, 0
    %147 = vmatprep.subr.bf16.mxu0 0
    %148 = vmatpush1.bf16.msra.mxu0 %v131
    %149 = vmatprep.subr.bf16.mxu0 0
    %150 = vmatpush1.bf16.msra.mxu0 %v132
    %151 = vmatprep.subr.bf16.mxu0 0
    %152 = vmatpush1.bf16.msra.mxu0 %v133
    %153 = vmatprep.subr.bf16.mxu0 0
    %154 = vmatpush1.bf16.msra.mxu0 %v134
    %155 = vmatprep.subr.bf16.mxu0 0
    %156 = vmatpush1.bf16.msra.mxu0 %v135
    %157 = vmatprep.subr.bf16.mxu0 0
    %158 = vmatpush1.bf16.msra.mxu0 %v136
    %159 = vmatprep.subr.bf16.mxu0 0
    %160 = vmatpush1.bf16.msra.mxu0 0
    %161 = vmatprep.subr.bf16.mxu0 0
    %162 = vmatpush1.bf16.msra.mxu0 0
    %163 = vmatprep.subr.bf16.mxu0 0
    %164 = vmatpush1.bf16.msra.mxu0 0
    %165 = vmatprep.subr.bf16.mxu0 0
    %166 = vmatpush1.bf16.msra.mxu0 0
    %167 = vmatprep.subr.bf16.mxu0 0
    %168 = vmatpush1.bf16.msra.mxu0 0
    %169 = vmatprep.subr.bf16.mxu0 0
    %170 = vmatpush1.bf16.msra.mxu0 0
    %171 = vmatprep.subr.bf16.mxu0 0
    %172 = vmatpush1.bf16.msra.mxu0 0
    %173 = vmatprep.subr.bf16.mxu0 0
    %174 = vmatpush1.bf16.msra.mxu0 0
    %175 = vmatprep.subr.bf16.mxu0 0
    %176 = vmatpush1.bf16.msra.mxu0 0
    %177 = vmatprep.subr.bf16.mxu0 0
    %178 = vmatpush1.bf16.msra.mxu0 0
    %179 = vmatprep.mubr.bf16.mxu0 0
    %180 = vmatmul.mubr.bf16.gmra.mrb[0].mxu0 %v145
    %v181 = vpop.f32.mrb[0].mxu0
    %v182 = vadd.f32 %v100, %v181
    %v183 = vpop.f32.mrb[0].mxu0
    %v184 = vpop.f32.mrb[0].mxu0
    %v185 = vadd.f32 %v100, %v184
    %v186 = vpop.f32.mrb[0].mxu0
    %187 = vdwg.mxu0
    %v188 = vtanh.pop %v182
    %v189 = vtanh.pop %v185
    %v190 = vmul.f32 %v188, 1.442695
    %v191 = vpow.pop %v190
    %v192 = vmul.f32 %v189, 1.442695
    %v193 = vpow.pop %v192
    %v194 = vld [vmem:[%s1] sm:$0x3]
    %v196 = vlaneseq
    %v197 = vshrl.u32 %v196, 7
    %v198 = vsub.s32 0, %v197
    %v199 = vrot.slane %v194, %v198
    %201 = vbcast.lane.b32.xlu0 %v199, 256
    %v202 = vpop.permute.xlu0 %201
    %v203 = vlaneseq
    %v204 = vshrl.u32 %v203, 7
    %v205 = vsub.s32 1, %v204
    %v206 = vrot.slane %v194, %v205
    %208 = vbcast.lane.b32.xlu0 %v206, 256
    %v209 = vpop.permute.xlu0 %208
    %v212 = vmul.f32 %v191, %v202
    %v213 = vmul.f32 %v193, %v209
    %216 = vset.pattern.permute.xlu0 32
    %217 = vperm.xlu0 %216, %v212
    %v218 = vpop.permute.xlu0 %217
    %219 = vset.pattern.permute.xlu0 32
    %220 = vperm.xlu0 %219, %v213
    %v221 = vpop.permute.xlu0 %220
    %v222 = vlaneseq
    %v223 = vand.u32 %v222, 127
    %v224 = vlaneseq
    %v225 = vshrl.u32 %v224, 7
    %v226 = vsub.s32 %v223, %v225
    %v227 = vrot.slane %v218, %v226
    %v228 = vlaneseq
    %v229 = vshrl.u32 %v228, 7
    %v230 = vsub.s32 %v223, %v229
    %v231 = vrot.slane %v221, %v230
    %vm232 = vcmask 1041409
    %v233 = vsel %vm232, %v231, %v227
    %vm235 = vcmask 58368
    %v236 = vsel %vm235, %v233, 0.0
    %237 = vadd.xlane.f32.xlu0 %v236
    %v238 = vpop.xlane.xlu0 %237
    %v239 = vadd.f32 %v238, 1e-06
    %v241 = vlaneseq
    %v242 = vshrl.u32 %v241, 7
    %v243 = vsub.s32 0, %v242
    %v244 = vrot.slane %v239, %v243
    %v245 = vlaneseq
    %v246 = vshrl.u32 %v245, 7
    %v247 = vsub.s32 1, %v246
    %v248 = vrot.slane %v239, %v247
    %v251 = vrcp.pop %v244
    %v252 = vmul.f32 %v212, %v251
    %v253 = vrcp.pop %v248
    %v254 = vmul.f32 %v213, %v253
    %256 = vset.pattern.permute.xlu0 32
    %257 = vperm.xlu0 %256, %v252
    %v258 = vpop.permute.xlu0 %257
    %261 = vset.pattern.permute.xlu0 32
    %262 = vperm.xlu0 %261, %v254
    %v263 = vpop.permute.xlu0 %262
    %v265 = vmul.f32 %v258, %v182
    %v266 = vmul.f32 %v263, %v185
    %v267 = vrot.slane %v265, 4
    %v268 = vadd.f32 %v265, %v267
    %v269 = vrot.slane %v268, 2
    %v270 = vadd.f32 %v268, %v269
    %v271 = vrot.slane %v270, 1
    %v272 = vadd.f32 %v270, %v271
    %v273 = vrot.slane %v266, 4
    %v274 = vadd.f32 %v266, %v273
    %v275 = vrot.slane %v274, 2
    %v276 = vadd.f32 %v274, %v275
    %v277 = vrot.slane %v276, 1
    %v278 = vadd.f32 %v276, %v277
    %v279 = vpack.c.bf16 %v272, %v272
    %v280 = vpack.c.bf16 %v278, %v278
    %v284 = vunpack.c.l.s4 1966171168
    %v285 = vunpack.c.0.s8 %v284
    %v286 = vlaneseq
    %v287 = vshrl.u32 %v286, 7
    %v288 = vsub.s32 %v285, %v287
    %v289 = vrot.slane %v279, %v288
    %v291 = vunpack.c.l.s4 1966171168
    %v292 = vunpack.c.0.s8 %v291
    %v293 = vlaneseq
    %v294 = vshrl.u32 %v293, 7
    %v295 = vsub.s32 %v292, %v294
    %v296 = vrot.slane %v289, %v295
    %v298 = vunpack.c.l.s4 1966171168
    %v299 = vunpack.c.0.s8 %v298
    %v300 = vlaneseq
    %v301 = vshrl.u32 %v300, 7
    %v302 = vsub.s32 %v299, %v301
    %v303 = vrot.slane %v280, %v302
    %v305 = vunpack.c.l.s4 1966171168
    %v306 = vunpack.c.0.s8 %v305
    %v307 = vlaneseq
    %v308 = vshrl.u32 %v307, 7
    %v309 = vsub.s32 %v306, %v308
    %v310 = vrot.slane %v303, %v309
    %v312 = vunpack.c.l.s4 1935823168
    %v313 = vunpack.c.0.s8 %v312
    %v314 = vlaneseq
    %v315 = vshrl.u32 %v314, 7
    %v316 = vsub.s32 %v313, %v315
    %v317 = vrot.slane %v296, %v316
    %v319 = vunpack.c.l.s4 1935823168
    %v320 = vunpack.c.0.s8 %v319
    %v321 = vlaneseq
    %v322 = vshrl.u32 %v321, 7
    %v323 = vsub.s32 %v320, %v322
    %v324 = vrot.slane %v317, %v323
    %v326 = vunpack.c.l.s4 1935823168
    %v327 = vunpack.c.0.s8 %v326
    %v328 = vlaneseq
    %v329 = vshrl.u32 %v328, 7
    %v330 = vsub.s32 %v327, %v329
    %v331 = vrot.slane %v310, %v330
    %v333 = vunpack.c.l.s4 1935823168
    %v334 = vunpack.c.0.s8 %v333
    %v335 = vlaneseq
    %v336 = vshrl.u32 %v335, 7
    %v337 = vsub.s32 %v334, %v336
    %v338 = vrot.slane %v331, %v337
    %v339 = vunpack.c.l.b16 %v324
    %v340 = vunpack.c.l.b16 %v338
    %v341 = vrot.slane %v340, 7
    %v342 = vsel %vm232, %v341, %v339
    %v343 = vpack.c.b16 %v342, %v342
    %v345 = vunpack.c.l.s4 1966171168
    %v346 = vunpack.c.0.s8 %v345
    %v347 = vlaneseq
    %v348 = vshrl.u32 %v347, 7
    %v349 = vsub.s32 %v346, %v348
    %v350 = vrot.slane %v343, %v349
    %v352 = vunpack.c.l.s4 1966171168
    %v353 = vunpack.c.0.s8 %v352
    %v354 = vlaneseq
    %v355 = vshrl.u32 %v354, 7
    %v356 = vsub.s32 %v353, %v355
    %v357 = vrot.slane %v350, %v356
    %359 = vst [vmem:[#allocation5] sm:$0x1] %v357
    // Predicated region
    $region22: #{tpu_custom_call.1} parent=1 // pred_check
      _
    $region23: #{tpu_custom_call.1} parent=1 // pred_check_branch
      %361 = sbr.rel (0) target = $region25
    $region24: #{tpu_custom_call.1} parent=1 // pred_region
      %s363 = ssub.s32 16, 16
      %364 = vsyncadd [#allocation4], %s363
      %s366 = sshll.u32 [#allocation5], 4
      %s367 = int_to_ptr.vmem [resolvable:$true] %s366
      %369 = dma.vmem_to_hbm [thread:$0]  %s367, 16, %s4, [#allocation4]
    $region25: #{tpu_custom_call.1} parent=1 // pred_fallthru
      _
    // Predicated region
    $region26: #{tpu_custom_call.1} parent=1 // pred_check
      _
    $region27: #{tpu_custom_call.1} parent=1 // pred_check_branch
      %371 = sbr.rel (0) target = $region29
    $region28: #{tpu_custom_call.1} parent=1 // pred_region
      %372 = dma.done [#allocation4], 16
    $region29: #{tpu_custom_call.1} parent=1 // pred_fallthru
      _
    %373 = vsyncpa [#allocation3], 1
    %374 = vsyncpa [#allocation4], 1

</llo_original>
